<compile_context>
chip_gen: v7x
topology: tpu7x:2x2x1
jax: 0.10.0
libtpu: 0.0.40
codegen_flags: <defaults>
</compile_context>

<pallas_src>
import functools

import jax
import jax.numpy as jnp
import numpy as np
from jax.experimental import pallas as pl
from jax.experimental.pallas import tpu as pltpu  # noqa: F401  (TPU backend namespace)


def _identity_noop_kernel(x_hbm_ref, o_hbm_ref):
    # The output aliases the input HBM buffer, so identity requires moving
    # zero bytes.  Intentionally empty body: the aliased buffer already holds
    # the correct data.
    del x_hbm_ref, o_hbm_ref


def _print_size(shape):
    # Host-side side effect matching the PyTorch module's print.
    print("tensor size:", shape)


def countlayer_forward(x):
    """Identity forward pass of `countlayer` (prints size, returns x)."""
    # Per-call print (fires each execution, not just at trace time).
    jax.debug.callback(functools.partial(_print_size, tuple(x.shape)))

    return pl.pallas_call(
        _identity_noop_kernel,
        out_shape=jax.ShapeDtypeStruct(x.shape, x.dtype),
        # Raw HBM refs: no BlockSpec tiling, no auto-DMA, no VMEM staging.
        in_specs=[pl.BlockSpec(memory_space=pl.ANY)],
        out_specs=pl.BlockSpec(memory_space=pl.ANY),
        # Output aliases the input: identity moves zero bytes when the caller
        # donates the input buffer (see jit wrapper in __main__).
        input_output_aliases={0: 0},
        # Advisory hint: this custom call touches no memory and does no math.
        cost_estimate=pl.CostEstimate(flops=0, transcendentals=0, bytes_accessed=0),
    )(x)


if __name__ == "__main__":
    key = jax.random.PRNGKey(0)
    # Small shape consistent with a conv-net feature map: NCHW = (2, 4, 16, 16)
    x = jax.random.normal(key, (2, 4, 16, 16), dtype=jnp.float32)

    # Snapshot the expected values on host BEFORE the call: the input buffer
    # is donated so the output alias is realized with zero copies, which
    # invalidates x's device buffer after the call.
    expected = np.asarray(jax.device_get(x))

    # Donation makes input_output_aliases a genuine zero-copy aliasing instead
    # of forcing XLA to insert a defensive copy of x.
    fwd = jax.jit(countlayer_forward, donate_argnums=0)

    y = fwd(x)
    y = jax.block_until_ready(y)

    assert y.shape == expected.shape and y.dtype == expected.dtype
    assert np.array_equal(np.asarray(jax.device_get(y)), expected)

    jax.effects_barrier()  # flush the per-call debug print before the marker
    print("KERNEL_OK")
</pallas_src>

<mosaic_0001>
module attributes {stable_mosaic.version = 11 : i64} {
  func.func @_identity_noop_kernel(%arg0: memref<2x4x16x16xf32, #tpu.memory_space<any>>, %arg1: memref<2x4x16x16xf32, #tpu.memory_space<any>>) attributes {dimension_semantics = [], scalar_prefetch = 0 : i64, scratch_operands = 0 : i64, tpu.core_type = #tpu.core_type<tc>} {
    return
  }
}

</mosaic_0001>

<llo_original>
// kernel: countlayer_forward.1
$region0: #{countlayer_forward.1}
  #allocation0 [shape = 'u32[]', space=smem, size = 0x4, offset = 0x4, fixed_abs, tag = 'smem constant byte address 0x4 - core index']
  #allocation1 [shape = 'u32[144,128]{1,0:T(1,128)}', space=vmem, size = 0x12000, scoped, tag = 'internal scratch']
  %s0 = inlined_call_operand.hbm [shape: f32[2,4,16,16], index: 0, kind: input, shape index: {}, may-alias: {0,1}]
  %s1 = inlined_call_operand.hbm [shape: f32[2,4,16,16], index: 1, kind: output, shape index: {}, may-alias: {0,1}]
  %s2 = sld [smem:[#allocation0]]
  $region2: #{countlayer_forward.1} parent=0
    _
  %s4 = ssub.s32 1, %s2
  %s5 = scalar_select 0, %s4, %s2

</llo_original>
